<compile_context>
chip_gen: v7x
topology: tpu7x:2x2x1
jax: 0.10.0
libtpu: 0.0.40
codegen_flags: <defaults>
</compile_context>

<pallas_src>
import functools

import jax
import jax.numpy as jnp
from jax.experimental import pallas as pl
from jax.experimental.pallas import tpu as pltpu

LANE = 128


def _round_up(n, m):
    return ((n + m - 1) // m) * m


def _choose_tile_b(B, max_tile=512):
    """Largest multiple-of-8 divisor of B, capped at max_tile, preferring >=2 grid steps
    (keeps both v7x TensorCores busy).  Falls back to a single full-extent block."""
    if B % 8 != 0:
        return B  # full-array block is always legal
    for cap in (min(max_tile, B // 2), min(max_tile, B)):
        best = 0
        for t in range(8, cap + 1, 8):
            if B % t == 0:
                best = t
        if best:
            return best
    return B


def _mlp_kernel(n_hidden, *refs):
    # refs = (x_ref, W1, b1, W2, b2, ..., Wout, bout, o_ref)
    x_ref = refs[0]
    o_ref = refs[-1]
    p = refs[1:-1]

    h = x_ref[...]  # bf16 (tile_b, in_feat) — already MXU-ready, no cast needed

    # Hidden layers: Linear -> ReLU (-> Dropout == identity in eval mode).
    # bf16 MXU inputs, f32 accumulation; bias-add / ReLU stay f32 (v5e-friendly).
    for li in range(n_hidden):
        w = p[2 * li][...]       # bf16 (fan_in, hid_pad)
        b = p[2 * li + 1][...]   # f32  (1, hid_pad)
        h = jnp.dot(h, w, preferred_element_type=jnp.float32) + b
        h = jnp.maximum(h, 0.0).astype(w.dtype)  # back to bf16 for the next MXU push

    # Output layer.  Padded output lanes get logits == -1e30 straight from the bias
    # (their W columns are exactly zero), so no iota/where mask is needed here.
    wo = p[2 * n_hidden][...]
    bo = p[2 * n_hidden + 1][...]
    logits = jnp.dot(h, wo, preferred_element_type=jnp.float32) + bo

    # log_softmax over dim=1 (feature axis), f32.
    m = jnp.max(logits, axis=1, keepdims=True)
    shifted = logits - m
    lse = jnp.log(jnp.sum(jnp.exp(shifted), axis=1, keepdims=True))
    o_ref[...] = (shifted - lse).astype(o_ref.dtype)


def my_network_forward(x, params, out_features, *, tile_b=512):
    """x: (B, input_size) float.  params: list of (W bf16 (fan_in, fan_out_pad), b f32 (1, fan_out_pad))."""
    n_hidden = len(params) - 1
    B, in_feat = x.shape
    assert params[0][0].shape[0] == in_feat, "first-layer fan-in must match x features"
    out_pad = params[-1][0].shape[1]

    # bf16 MXU input; no lane- or batch-padding of x is materialized in HBM.
    x = x.astype(jnp.bfloat16)

    tile_b = _choose_tile_b(B, tile_b)
    num_tiles = B // tile_b

    flat_params = []
    for w, b in params:
        flat_params += [w, b]

    x_spec = pl.BlockSpec((tile_b, in_feat), lambda i: (i, 0))
    # Weights/biases stay resident in VMEM across the whole batch grid (constant index_map).
    param_specs = [pl.BlockSpec(p.shape, lambda i: (0, 0)) for p in flat_params]
    out_spec = pl.BlockSpec((tile_b, out_pad), lambda i: (i, 0))

    # Advisory cost estimate so XLA schedules neighbouring ops around this tiny kernel.
    flops = 2 * B * sum(w.shape[0] * w.shape[1] for w, _ in params)
    bytes_accessed = int(x.size * 2 + B * out_pad * 4
                         + sum(w.size * 2 + b.size * 4 for w, b in params))
    cost = pl.CostEstimate(flops=flops,
                           transcendentals=B * (out_pad + 1),
                           bytes_accessed=bytes_accessed)

    kernel = functools.partial(_mlp_kernel, n_hidden)

    out = pl.pallas_call(
        kernel,
        out_shape=jax.ShapeDtypeStruct((B, out_pad), jnp.float32),
        grid=(num_tiles,),
        in_specs=[x_spec] + param_specs,
        out_specs=out_spec,
        compiler_params=pltpu.CompilerParams(
            dimension_semantics=("parallel",),
        ),
        cost_estimate=cost,
    )(x, *flat_params)

    return out[:, :out_features]


def init_params(key, input_size, hidden_layers, output_size, lane=LANE):
    """PyTorch-Linear-style init, stored transposed as (fan_in, fan_out).

    * First-layer fan-in stays at input_size, so x needs no lane padding.
    * Every fan-out (and every later fan-in) is zero-padded to a lane multiple; padded hidden
      activations are ReLU(0)=0 and contribute nothing downstream.
    * The FINAL bias's padded lanes hold -1e30 (its padded W columns are exactly zero), so
      padded logits equal -1e30 and vanish in log_softmax with no in-kernel mask.
    * Weights bf16 (MXU inputs), biases f32.
    """
    sizes = [input_size] + list(hidden_layers) + [output_size]
    padded = [input_size] + [_round_up(s, lane) for s in sizes[1:]]
    n_layers = len(sizes) - 1
    params = []
    for i in range(n_layers):
        fan_in, fan_out = sizes[i], sizes[i + 1]
        pin, pout = padded[i], padded[i + 1]
        key, kw, kb = jax.random.split(key, 3)
        bound = 1.0 / float(fan_in) ** 0.5
        w = jax.random.uniform(kw, (fan_in, fan_out), jnp.float32, -bound, bound)
        b = jax.random.uniform(kb, (1, fan_out), jnp.float32, -bound, bound)
        w = jnp.pad(w, ((0, pin - fan_in), (0, pout - fan_out))).astype(jnp.bfloat16)
        pad_val = -1e30 if i == n_layers - 1 else 0.0
        b = jnp.pad(b, ((0, 0), (0, pout - fan_out)), constant_values=pad_val)
        params.append((w, b))
    return params


def reference_forward(x, params, out_features):
    """Pure-JAX reference using the identical bf16-weight / f32-accumulate path."""
    h = x.astype(jnp.bfloat16)
    for w, b in params[:-1]:
        h = jnp.dot(h, w, preferred_element_type=jnp.float32) + b
        h = jnp.maximum(h, 0.0).astype(jnp.bfloat16)
    wo, bo = params[-1]
    logits = jnp.dot(h, wo, preferred_element_type=jnp.float32) + bo
    logits = logits[:, :out_features]
    return jax.nn.log_softmax(logits, axis=1)


if __name__ == "__main__":
    # Module-consistent small shapes: input_size=32, hidden_layers=[64, 32], output_size=16.
    # B=64 -> tile_b=32: a 2-step "parallel" batch grid (both v7x TensorCores busy).
    B, input_size, hidden_layers, output_size = 64, 32, [64, 32], 16

    key = jax.random.PRNGKey(0)
    key, kx = jax.random.split(key)
    x = jax.random.normal(kx, (B, input_size), dtype=jnp.float32)

    params = init_params(key, input_size, hidden_layers, output_size)

    out = my_network_forward(x, params, output_size)
    out = jax.block_until_ready(out)

    ref = reference_forward(x, params, output_size)
    assert out.shape == (B, output_size)
    assert jnp.allclose(out, ref, atol=1e-3, rtol=1e-3), "mismatch vs reference"

    print("KERNEL_OK")
</pallas_src>

<mosaic_0001>
module attributes {stable_mosaic.version = 11 : i64} {
  func.func @_mlp_kernel(%arg0: i32, %arg1: memref<32x32xbf16, #tpu.memory_space<vmem>>, %arg2: memref<32x128xbf16, #tpu.memory_space<vmem>>, %arg3: memref<1x128xf32, #tpu.memory_space<vmem>>, %arg4: memref<128x128xbf16, #tpu.memory_space<vmem>>, %arg5: memref<1x128xf32, #tpu.memory_space<vmem>>, %arg6: memref<128x128xbf16, #tpu.memory_space<vmem>>, %arg7: memref<1x128xf32, #tpu.memory_space<vmem>>, %arg8: memref<32x128xf32, #tpu.memory_space<vmem>>) attributes {dimension_semantics = [#tpu.dimension_semantics<parallel>], iteration_bounds = array<i64: 2>, scalar_prefetch = 0 : i64, scratch_operands = 0 : i64, tpu.core_type = #tpu.core_type<tc>, window_params = [{transform_indices = @transform_0, window_bounds = array<i64: 32, 32>}, {pipeline_mode = #tpu.pipeline_mode<synchronous>, transform_indices = @transform_1, window_bounds = array<i64: 32, 128>}, {pipeline_mode = #tpu.pipeline_mode<synchronous>, transform_indices = @transform_2, window_bounds = array<i64: 1, 128>}, {pipeline_mode = #tpu.pipeline_mode<synchronous>, transform_indices = @transform_3, window_bounds = array<i64: 128, 128>}, {pipeline_mode = #tpu.pipeline_mode<synchronous>, transform_indices = @transform_4, window_bounds = array<i64: 1, 128>}, {pipeline_mode = #tpu.pipeline_mode<synchronous>, transform_indices = @transform_5, window_bounds = array<i64: 128, 128>}, {pipeline_mode = #tpu.pipeline_mode<synchronous>, transform_indices = @transform_6, window_bounds = array<i64: 1, 128>}, {transform_indices = @transform_7, window_bounds = array<i64: 32, 128>}]} {
    %c0 = arith.constant 0 : index
    %c0_0 = arith.constant 0 : index
    %0 = vector.load %arg1[%c0, %c0_0] : memref<32x32xbf16, #tpu.memory_space<vmem>>, vector<32x32xbf16>
    %c0_1 = arith.constant 0 : index
    %c0_2 = arith.constant 0 : index
    %1 = vector.load %arg2[%c0_1, %c0_2] : memref<32x128xbf16, #tpu.memory_space<vmem>>, vector<32x128xbf16>
    %c0_3 = arith.constant 0 : index
    %c0_4 = arith.constant 0 : index
    %2 = vector.load %arg3[%c0_3, %c0_4] : memref<1x128xf32, #tpu.memory_space<vmem>>, vector<1x128xf32>
    %cst = arith.constant dense<0.000000e+00> : vector<32x128xf32>
    %3 = tpu.matmul %0, %1, %cst {dimension_numbers = #tpu.dot_dimension_numbers<[1], [0], [0], [1], [0, 0, 1, 1], [], []>} : vector<32x32xbf16>, vector<32x128xbf16>, vector<32x128xf32> -> vector<32x128xf32>
    %4 = vector.broadcast %2 : vector<1x128xf32> to vector<32x128xf32>
    %5 = arith.addf %3, %4 : vector<32x128xf32>
    %cst_5 = arith.constant 0.000000e+00 : f32
    %6 = vector.broadcast %cst_5 : f32 to vector<32x128xf32>
    %7 = arith.maximumf %5, %6 : vector<32x128xf32>
    %8 = arith.truncf %7 : vector<32x128xf32> to vector<32x128xbf16>
    %c0_6 = arith.constant 0 : index
    %c0_7 = arith.constant 0 : index
    %9 = vector.load %arg4[%c0_6, %c0_7] : memref<128x128xbf16, #tpu.memory_space<vmem>>, vector<128x128xbf16>
    %c0_8 = arith.constant 0 : index
    %c0_9 = arith.constant 0 : index
    %10 = vector.load %arg5[%c0_8, %c0_9] : memref<1x128xf32, #tpu.memory_space<vmem>>, vector<1x128xf32>
    %cst_10 = arith.constant dense<0.000000e+00> : vector<32x128xf32>
    %11 = tpu.matmul %8, %9, %cst_10 {dimension_numbers = #tpu.dot_dimension_numbers<[1], [0], [0], [1], [0, 0, 1, 1], [], []>} : vector<32x128xbf16>, vector<128x128xbf16>, vector<32x128xf32> -> vector<32x128xf32>
    %12 = vector.broadcast %10 : vector<1x128xf32> to vector<32x128xf32>
    %13 = arith.addf %11, %12 : vector<32x128xf32>
    %cst_11 = arith.constant 0.000000e+00 : f32
    %14 = vector.broadcast %cst_11 : f32 to vector<32x128xf32>
    %15 = arith.maximumf %13, %14 : vector<32x128xf32>
    %16 = arith.truncf %15 : vector<32x128xf32> to vector<32x128xbf16>
    %c0_12 = arith.constant 0 : index
    %c0_13 = arith.constant 0 : index
    %17 = vector.load %arg6[%c0_12, %c0_13] : memref<128x128xbf16, #tpu.memory_space<vmem>>, vector<128x128xbf16>
    %c0_14 = arith.constant 0 : index
    %c0_15 = arith.constant 0 : index
    %18 = vector.load %arg7[%c0_14, %c0_15] : memref<1x128xf32, #tpu.memory_space<vmem>>, vector<1x128xf32>
    %cst_16 = arith.constant dense<0.000000e+00> : vector<32x128xf32>
    %19 = tpu.matmul %16, %17, %cst_16 {dimension_numbers = #tpu.dot_dimension_numbers<[1], [0], [0], [1], [0, 0, 1, 1], [], []>} : vector<32x128xbf16>, vector<128x128xbf16>, vector<32x128xf32> -> vector<32x128xf32>
    %20 = vector.broadcast %18 : vector<1x128xf32> to vector<32x128xf32>
    %21 = arith.addf %19, %20 : vector<32x128xf32>
    %cst_17 = arith.constant dense<0xFF800000> : vector<32xf32>
    %22 = vector.multi_reduction <maximumf>, %21, %cst_17 [1] : vector<32x128xf32> to vector<32xf32>
    %23 = vector.shape_cast %22 : vector<32xf32> to vector<32x1xf32>
    %24 = vector.broadcast %23 : vector<32x1xf32> to vector<32x128xf32>
    %25 = arith.subf %21, %24 : vector<32x128xf32>
    %26 = math.exp %25 : vector<32x128xf32>
    %cst_18 = arith.constant dense<0.000000e+00> : vector<32xf32>
    %27 = vector.multi_reduction <add>, %26, %cst_18 [1] : vector<32x128xf32> to vector<32xf32>
    %28 = vector.shape_cast %27 : vector<32xf32> to vector<32x1xf32>
    %29 = math.log %28 : vector<32x1xf32>
    %30 = vector.broadcast %29 : vector<32x1xf32> to vector<32x128xf32>
    %31 = arith.subf %25, %30 : vector<32x128xf32>
    %c0_19 = arith.constant 0 : index
    %c0_20 = arith.constant 0 : index
    %32 = vector.load %arg8[%c0_19, %c0_20] : memref<32x128xf32, #tpu.memory_space<vmem>>, vector<32x128xf32>
    tpu.vector_store %arg8[%c0_19, %c0_20], %31 {strides = array<i32>} : memref<32x128xf32, #tpu.memory_space<vmem>>, vector<32x128xf32>,
    return
  }
  func.func @transform_0(%arg0: i32) -> (i32, i32) {
    %c0_i32 = arith.constant 0 : i32
    %c0_i32_0 = arith.constant 0 : i32
    return %arg0, %c0_i32 : i32, i32
  }
  func.func @transform_1(%arg0: i32) -> (i32, i32) {
    %c0_i32 = arith.constant 0 : i32
    %c0_i32_0 = arith.constant 0 : i32
    %c0_i32_1 = arith.constant 0 : i32
    return %c0_i32, %c0_i32_0 : i32, i32
  }
  func.func @transform_2(%arg0: i32) -> (i32, i32) {
    %c0_i32 = arith.constant 0 : i32
    %c0_i32_0 = arith.constant 0 : i32
    %c0_i32_1 = arith.constant 0 : i32
    return %c0_i32, %c0_i32_0 : i32, i32
  }
  func.func @transform_3(%arg0: i32) -> (i32, i32) {
    %c0_i32 = arith.constant 0 : i32
    %c0_i32_0 = arith.constant 0 : i32
    %c0_i32_1 = arith.constant 0 : i32
    return %c0_i32, %c0_i32_0 : i32, i32
  }
  func.func @transform_4(%arg0: i32) -> (i32, i32) {
    %c0_i32 = arith.constant 0 : i32
    %c0_i32_0 = arith.constant 0 : i32
    %c0_i32_1 = arith.constant 0 : i32
    return %c0_i32, %c0_i32_0 : i32, i32
  }
  func.func @transform_5(%arg0: i32) -> (i32, i32) {
    %c0_i32 = arith.constant 0 : i32
    %c0_i32_0 = arith.constant 0 : i32
    %c0_i32_1 = arith.constant 0 : i32
    return %c0_i32, %c0_i32_0 : i32, i32
  }
  func.func @transform_6(%arg0: i32) -> (i32, i32) {
    %c0_i32 = arith.constant 0 : i32
    %c0_i32_0 = arith.constant 0 : i32
    %c0_i32_1 = arith.constant 0 : i32
    return %c0_i32, %c0_i32_0 : i32, i32
  }
  func.func @transform_7(%arg0: i32) -> (i32, i32) {
    %c0_i32 = arith.constant 0 : i32
    %c0_i32_0 = arith.constant 0 : i32
    return %arg0, %c0_i32 : i32, i32
  }
}

</mosaic_0001>

<llo_original>
// kernel: tpu_custom_call.1
$region0: #{tpu_custom_call.1}
  #allocation0 [shape = 'u32[]', space=smem, size = 0x4, offset = 0x4, fixed_abs, tag = 'smem constant byte address 0x4 - core index']
  #allocation1 [shape = 'u32[144,128]{1,0:T(1,128)}', space=vmem, size = 0x12000, scoped, tag = 'internal scratch']
  %s0 = inlined_call_operand.vmem [shape: bf16[64,32], index: 0, kind: input, shape index: {}]
  %s1 = inlined_call_operand.hbm [shape: bf16[32,128], index: 1, kind: input, shape index: {}]
  %s2 = inlined_call_operand.vmem [shape: f32[1,128], index: 2, kind: input, shape index: {}]
  %s3 = inlined_call_operand.hbm [shape: bf16[128,128], index: 3, kind: input, shape index: {}]
  %s4 = inlined_call_operand.vmem [shape: f32[1,128], index: 4, kind: input, shape index: {}]
  %s5 = inlined_call_operand.vmem [shape: bf16[128,128], index: 5, kind: input, shape index: {}]
  %s6 = inlined_call_operand.vmem [shape: f32[1,128], index: 6, kind: input, shape index: {}]
  %s7 = inlined_call_operand.hbm [shape: f32[64,128], index: 7, kind: output, shape index: {}]
  %s8 = sld [smem:[#allocation0]]
  $region69: #{tpu_custom_call.1} parent=0
    _
  %s10 = ssub.s32 1, %s8
  %s11 = scalar_select 0, %s10, %s8
  $region1: #{tpu_custom_call.1} parent=0
    #allocation2 [shape = 'u8[8192]{0}', space=vmem, size = 0x2000, scoped, tag = 'input window, operand 1, single buffered']
    #allocation3 [shape = 's32[2]{0}', space=sflag, size = 0x8, scoped, tag = 'scoped memory for tpu_custom_call.1']
    #allocation4 [shape = 's32[2]{0}', space=sflag, size = 0x8, scoped, tag = 'scoped memory for tpu_custom_call.1']
    #allocation5 [shape = 'u8[32768]{0}', space=vmem, size = 0x8000, scoped, tag = 'input window, operand 3, single buffered']
    #allocation6 [shape = 's32[1]{0}', space=sflag, size = 0x4, scoped, tag = 'scoped memory for tpu_custom_call.1']
    #allocation7 [shape = 'u8[32768]{0}', space=vmem, size = 0x8000, scoped, tag = 'output window, operand 0']
    %12 = vsyncpa [#allocation3], 0
    %13 = vsyncpa [#allocation6], 0
    %14 = vsyncpa [#allocation4], 0
    %s15 = scalar_lea.sflag [#allocation4], 1
    %16 = vsyncpa %s15, 0
    loop: start=0, step=1, limit=4
    $region2: #{tpu_custom_call.1} parent=1 // loop_pre_header
      _
    $region3: #{tpu_custom_call.1} parent=1 // loop_header
      %s18 = sphi 0, %s22
      %p19 = scmp.ge.s32.totalorder %s18, 4
      %s28 = sphi 0, %s30
      %s31 = sphi 0, %s28
      %s32 = sphi 0, %s31
      %s48 = sphi 0, %s32
      %s52 = sphi 0, %s52
      %s54 = sphi 0, %s52
      %s55 = sphi 0, %s54
      %s69 = sphi 0, %s55
      %s73 = sphi 0, %s73
      %s75 = sphi 0, %s73
      %s76 = sphi 0, %s75
      %s90 = sphi 0, %s76
      %s94 = sphi 0, %s94
      %s96 = sphi 0, %s94
      %s97 = sphi 0, %s96
      %s111 = sphi 0, %s97
      %s115 = sphi 0, %s115
      %s117 = sphi 0, %s115
      %s118 = sphi 0, %s117
      %s132 = sphi 0, %s118
      %s136 = sphi 0, %s136
      %s138 = sphi 0, %s136
      %s139 = sphi 0, %s138
      %s153 = sphi 0, %s139
      %s157 = sphi 0, %s157
      %s159 = sphi 0, %s157
      %s160 = sphi 0, %s159
      %s174 = sphi 0, %s160
      %s180 = sphi 0, %s182
      %s183 = sphi 0, %s180
      %s184 = sphi 0, %s183
      %s200 = sphi 0, %s184
    $region4: #{tpu_custom_call.1} parent=1 // loop_header_branch
      %21 = sbr.rel (%p19) target = $region8
    $region5: #{tpu_custom_call.1} parent=1 // loop_body
      %s23 = ssub.s32 %s18, 1
      %s24 = ssub.s32 %s18, 2
      %s25 = sadd.s32 %s18, 1
      %s26 = ssub.s32 %s18, %s25
      %p27 = scmp.eq.s32.totalorder %s26, 0
      %s29 = sadd.s32 %s28, 1
      %s30 = scalar_select %p27, %s28, %s29
      %p33 = pneg %p27
      %p34 = scmp.eq.s32.totalorder %s18, 1
      %p35 = por %p33, %p34
      %p36 = scmp.ne.s32.totalorder %s28, %s31
      %p37 = scmp.eq.s32.totalorder %s18, 0
      %p38 = por %p36, %p37
      %p39 = scmp.ne.s32.totalorder %s28, %s31
      %p40 = scmp.eq.s32.totalorder %s23, 1
      %p41 = por %p39, %p40
      %p42 = scmp.ne.s32.totalorder %s31, %s32
      %p43 = scmp.eq.s32.totalorder %s23, 0
      %p44 = por %p42, %p43
      %p45 = scmp.ne.s32.totalorder %s31, %s32
      %p46 = scmp.eq.s32.totalorder %s24, 1
      %p47 = por %p45, %p46
      %p49 = scmp.ne.s32.totalorder %s32, %s48
      %p50 = scmp.eq.s32.totalorder %s24, 0
      %p51 = por %p49, %p50
      %s53 = sadd.s32 %s52, 1
      %p56 = scmp.eq.s32.totalorder %s18, 1
      %p57 = scmp.ne.s32.totalorder %s52, %s54
      %p58 = scmp.eq.s32.totalorder %s18, 0
      %p59 = por %p57, %p58
      %p60 = scmp.ne.s32.totalorder %s52, %s54
      %p61 = scmp.eq.s32.totalorder %s23, 1
      %p62 = por %p60, %p61
      %p63 = scmp.ne.s32.totalorder %s54, %s55
      %p64 = scmp.eq.s32.totalorder %s23, 0
      %p65 = por %p63, %p64
      %p66 = scmp.ne.s32.totalorder %s54, %s55
      %p67 = scmp.eq.s32.totalorder %s24, 1
      %p68 = por %p66, %p67
      %p70 = scmp.ne.s32.totalorder %s55, %s69
      %p71 = scmp.eq.s32.totalorder %s24, 0
      %p72 = por %p70, %p71
      %s74 = sadd.s32 %s73, 1
      %p77 = scmp.eq.s32.totalorder %s18, 1
      %p78 = scmp.ne.s32.totalorder %s73, %s75
      %p79 = scmp.eq.s32.totalorder %s18, 0
      %p80 = por %p78, %p79
      %p81 = scmp.ne.s32.totalorder %s73, %s75
      %p82 = scmp.eq.s32.totalorder %s23, 1
      %p83 = por %p81, %p82
      %p84 = scmp.ne.s32.totalorder %s75, %s76
      %p85 = scmp.eq.s32.totalorder %s23, 0
      %p86 = por %p84, %p85
      %p87 = scmp.ne.s32.totalorder %s75, %s76
      %p88 = scmp.eq.s32.totalorder %s24, 1
      %p89 = por %p87, %p88
      %p91 = scmp.ne.s32.totalorder %s76, %s90
      %p92 = scmp.eq.s32.totalorder %s24, 0
      %p93 = por %p91, %p92
      %s95 = sadd.s32 %s94, 1
      %p98 = scmp.eq.s32.totalorder %s18, 1
      %p99 = scmp.ne.s32.totalorder %s94, %s96
      %p100 = scmp.eq.s32.totalorder %s18, 0
      %p101 = por %p99, %p100
      %p102 = scmp.ne.s32.totalorder %s94, %s96
      %p103 = scmp.eq.s32.totalorder %s23, 1
      %p104 = por %p102, %p103
      %p105 = scmp.ne.s32.totalorder %s96, %s97
      %p106 = scmp.eq.s32.totalorder %s23, 0
      %p107 = por %p105, %p106
      %p108 = scmp.ne.s32.totalorder %s96, %s97
      %p109 = scmp.eq.s32.totalorder %s24, 1
      %p110 = por %p108, %p109
      %p112 = scmp.ne.s32.totalorder %s97, %s111
      %p113 = scmp.eq.s32.totalorder %s24, 0
      %p114 = por %p112, %p113
      %s116 = sadd.s32 %s115, 1
      %p119 = scmp.eq.s32.totalorder %s18, 1
      %p120 = scmp.ne.s32.totalorder %s115, %s117
      %p121 = scmp.eq.s32.totalorder %s18, 0
      %p122 = por %p120, %p121
      %p123 = scmp.ne.s32.totalorder %s115, %s117
      %p124 = scmp.eq.s32.totalorder %s23, 1
      %p125 = por %p123, %p124
      %p126 = scmp.ne.s32.totalorder %s117, %s118
      %p127 = scmp.eq.s32.totalorder %s23, 0
      %p128 = por %p126, %p127
      %p129 = scmp.ne.s32.totalorder %s117, %s118
      %p130 = scmp.eq.s32.totalorder %s24, 1
      %p131 = por %p129, %p130
      %p133 = scmp.ne.s32.totalorder %s118, %s132
      %p134 = scmp.eq.s32.totalorder %s24, 0
      %p135 = por %p133, %p134
      %s137 = sadd.s32 %s136, 1
      %p140 = scmp.eq.s32.totalorder %s18, 1
      %p141 = scmp.ne.s32.totalorder %s136, %s138
      %p142 = scmp.eq.s32.totalorder %s18, 0
      %p143 = por %p141, %p142
      %p144 = scmp.ne.s32.totalorder %s136, %s138
      %p145 = scmp.eq.s32.totalorder %s23, 1
      %p146 = por %p144, %p145
      %p147 = scmp.ne.s32.totalorder %s138, %s139
      %p148 = scmp.eq.s32.totalorder %s23, 0
      %p149 = por %p147, %p148
      %p150 = scmp.ne.s32.totalorder %s138, %s139
      %p151 = scmp.eq.s32.totalorder %s24, 1
      %p152 = por %p150, %p151
      %p154 = scmp.ne.s32.totalorder %s139, %s153
      %p155 = scmp.eq.s32.totalorder %s24, 0
      %p156 = por %p154, %p155
      %s158 = sadd.s32 %s157, 1
      %p161 = scmp.eq.s32.totalorder %s18, 1
      %p162 = scmp.ne.s32.totalorder %s157, %s159
      %p163 = scmp.eq.s32.totalorder %s18, 0
      %p164 = por %p162, %p163
      %p165 = scmp.ne.s32.totalorder %s157, %s159
      %p166 = scmp.eq.s32.totalorder %s23, 1
      %p167 = por %p165, %p166
      %p168 = scmp.ne.s32.totalorder %s159, %s160
      %p169 = scmp.eq.s32.totalorder %s23, 0
      %p170 = por %p168, %p169
      %p171 = scmp.ne.s32.totalorder %s159, %s160
      %p172 = scmp.eq.s32.totalorder %s24, 1
      %p173 = por %p171, %p172
      %p175 = scmp.ne.s32.totalorder %s160, %s174
      %p176 = scmp.eq.s32.totalorder %s24, 0
      %p177 = por %p175, %p176
      %s178 = ssub.s32 %s18, %s25
      %p179 = scmp.eq.s32.totalorder %s178, 0
      %s181 = sadd.s32 %s180, 1
      %s182 = scalar_select %p179, %s180, %s181
      %p185 = pneg %p179
      %p186 = scmp.eq.s32.totalorder %s18, 1
      %p187 = por %p185, %p186
      %p188 = scmp.ne.s32.totalorder %s180, %s183
      %p189 = scmp.eq.s32.totalorder %s18, 0
      %p190 = por %p188, %p189
      %p191 = scmp.ne.s32.totalorder %s180, %s183
      %p192 = scmp.eq.s32.totalorder %s23, 1
      %p193 = por %p191, %p192
      %p194 = scmp.ne.s32.totalorder %s183, %s184
      %p195 = scmp.eq.s32.totalorder %s23, 0
      %p196 = por %p194, %p195
      %p197 = scmp.ne.s32.totalorder %s183, %s184
      %p198 = scmp.eq.s32.totalorder %s24, 1
      %p199 = por %p197, %p198
      %p201 = scmp.ne.s32.totalorder %s184, %s200
      %p202 = scmp.eq.s32.totalorder %s24, 0
      %p203 = por %p201, %p202
      %p204 = scmp.le.s32.totalorder 1, %s18
      %p205 = scmp.lt.s32.totalorder %s18, 3
      %p206 = pnand %p204, %p205
      %p207 = pneg %p206
      // Predicated region
      $region9: #{tpu_custom_call.1} parent=5 // pred_check
        _
      $region10: #{tpu_custom_call.1} parent=5 // pred_check_branch
        %209 = sbr.rel (%p206) target = $region12
      $region11: #{tpu_custom_call.1} parent=5 // pred_region
        %s210 = ssub.s32 %s18, 1
        // Predicated region
        $region13: #{tpu_custom_call.1} parent=11 // pred_check
          %p211 = pneg %p65
        $region14: #{tpu_custom_call.1} parent=11 // pred_check_branch
          %213 = sbr.rel (%p211) target = $region16
        $region15: #{tpu_custom_call.1} parent=11 // pred_region
          %s215 = ssub.s32 256, 256
          %216 = vsyncadd [#allocation3], %s215
          %s217 = sshll.u32 [#allocation2], 4
          %s218 = int_to_ptr.vmem [resolvable:$true] %s217
          %223 = dma.hbm_to_vmem [thread:$0]  %s1, 256, %s218, [#allocation3], 64, 64, 4
        $region16: #{tpu_custom_call.1} parent=11 // pred_fallthru
          _
        // Predicated region
        $region17: #{tpu_custom_call.1} parent=11 // pred_check
          %p224 = pneg %p86
        $region18: #{tpu_custom_call.1} parent=11 // pred_check_branch
          %226 = sbr.rel (%p224) target = $region20
        $region19: #{tpu_custom_call.1} parent=11 // pred_region
          _
        $region20: #{tpu_custom_call.1} parent=11 // pred_fallthru
          _
        // Predicated region
        $region21: #{tpu_custom_call.1} parent=11 // pred_check
          %p227 = pneg %p107
        $region22: #{tpu_custom_call.1} parent=11 // pred_check_branch
          %229 = sbr.rel (%p227) target = $region24
        $region23: #{tpu_custom_call.1} parent=11 // pred_region
          %s231 = ssub.s32 1024, 1024
          %232 = vsyncadd [#allocation6], %s231
          %s233 = sshll.u32 [#allocation5], 4
          %s234 = int_to_ptr.vmem [resolvable:$true] %s233
          %239 = dma.hbm_to_vmem [thread:$0]  %s3, 1024, %s234, [#allocation6], 64, 64, 4
        $region24: #{tpu_custom_call.1} parent=11 // pred_fallthru
          _
        // Predicated region
        $region25: #{tpu_custom_call.1} parent=11 // pred_check
          %p240 = pneg %p128
        $region26: #{tpu_custom_call.1} parent=11 // pred_check_branch
          %242 = sbr.rel (%p240) target = $region28
        $region27: #{tpu_custom_call.1} parent=11 // pred_region
          _
        $region28: #{tpu_custom_call.1} parent=11 // pred_fallthru
          _
        // Predicated region
        $region29: #{tpu_custom_call.1} parent=11 // pred_check
          %p243 = pneg %p149
        $region30: #{tpu_custom_call.1} parent=11 // pred_check_branch
          %245 = sbr.rel (%p243) target = $region32
        $region31: #{tpu_custom_call.1} parent=11 // pred_region
          _
        $region32: #{tpu_custom_call.1} parent=11 // pred_fallthru
          _
        // Predicated region
        $region33: #{tpu_custom_call.1} parent=11 // pred_check
          %p246 = pneg %p170
        $region34: #{tpu_custom_call.1} parent=11 // pred_check_branch
          %248 = sbr.rel (%p246) target = $region36
        $region35: #{tpu_custom_call.1} parent=11 // pred_region
          _
        $region36: #{tpu_custom_call.1} parent=11 // pred_fallthru
          _
      $region12: #{tpu_custom_call.1} parent=5 // pred_fallthru
        _
      %p249 = scmp.lt.s32.totalorder %s18, 2
      // Predicated region
      $region37: #{tpu_custom_call.1} parent=5 // pred_check
        %p250 = pneg %p249
      $region38: #{tpu_custom_call.1} parent=5 // pred_check_branch
        %252 = sbr.rel (%p250) target = $region40
      $region39: #{tpu_custom_call.1} parent=5 // pred_region
        // Predicated region
        $region41: #{tpu_custom_call.1} parent=39 // pred_check
          %p253 = pneg %p38
        $region42: #{tpu_custom_call.1} parent=39 // pred_check_branch
          %255 = sbr.rel (%p253) target = $region44
        $region43: #{tpu_custom_call.1} parent=39 // pred_region
          %s256 = smul.u32 4, %s18
          %p257 = scmp.lt.s32.totalorder %s256, 7
          %s258 = scalar_select %p257, %s256, 7
          %s259 = smul.addr %s258, 4
          %s260 = scalar_lea.vmem %s0, %s259
          %s261 = smul.u32 4, %s18
        $region44: #{tpu_custom_call.1} parent=39 // pred_fallthru
          _
      $region40: #{tpu_custom_call.1} parent=5 // pred_fallthru
        _
      %p262 = scmp.le.s32.totalorder 1, %s18
      %p263 = scmp.lt.s32.totalorder %s18, 3
      %p264 = pnand %p262, %p263
      %p265 = pneg %p264
      // Predicated region
      $region45: #{tpu_custom_call.1} parent=5 // pred_check
        _
      $region46: #{tpu_custom_call.1} parent=5 // pred_check_branch
        %267 = sbr.rel (%p264) target = $region48
      $region47: #{tpu_custom_call.1} parent=5 // pred_region
        %s268 = ssub.s32 %s18, 1
        // Predicated region
        $region49: #{tpu_custom_call.1} parent=47 // pred_check
          %p269 = pneg %p65
        $region50: #{tpu_custom_call.1} parent=47 // pred_check_branch
          %271 = sbr.rel (%p269) target = $region52
        $region51: #{tpu_custom_call.1} parent=47 // pred_region
          %272 = dma.done [#allocation3], 256
        $region52: #{tpu_custom_call.1} parent=47 // pred_fallthru
          _
        // Predicated region
        $region53: #{tpu_custom_call.1} parent=47 // pred_check
          %p273 = pneg %p107
        $region54: #{tpu_custom_call.1} parent=47 // pred_check_branch
          %275 = sbr.rel (%p273) target = $region56
        $region55: #{tpu_custom_call.1} parent=47 // pred_region
          %276 = dma.done [#allocation6], 1024
        $region56: #{tpu_custom_call.1} parent=47 // pred_fallthru
          _
        %s277 = smul.u32 4, %s23
        %p278 = scmp.lt.s32.totalorder %s277, 7
        %s279 = scalar_select %p278, %s277, 7
        %s280 = smul.addr %s279, 4
        %s281 = scalar_lea.vmem %s0, %s280
        %p282 = pneg %p44
        %p283 = pneg %p41
        %p284 = pneg %p65
        %p285 = pneg %p62
        %p286 = pneg %p86
        %p287 = pneg %p83
        %p288 = pneg %p107
        %p289 = pneg %p104
        %p290 = pneg %p128
        %p291 = pneg %p125
        %p292 = pneg %p149
        %p293 = pneg %p146
        %p294 = pneg %p170
        %p295 = pneg %p167
        %p296 = pneg %p196
        %p297 = pneg %p193
        %s298 = sand.u32 %s183, 1
        %s299 = scalar_lea.sflag [#allocation4], %s298
        %s300 = sand.u32 %s183, 1
        %s301 = smul.addr %s300, 32
        %s302 = scalar_lea.vmem [#allocation7], %s301
        %s303 = smul.u32 4, %s23
        %p304 = scmp.lt.s32.totalorder %s303, 7
        %s305 = scalar_select %p304, %s303, 7
        %s306 = smul.addr %s305, 4
        %s307 = scalar_lea.vmem %s0, %s306
        %s308 = smul.u32 4, %s23
        %s309 = smul.u32 4, %s23
        %v311 = vld [vmem:[%s307] sm:$0xf]
        %v312 = vld [vmem:[%s307 + $0x4] sm:$0xf]
        %v313 = vld [vmem:[%s307 + $0x8] sm:$0xf]
        %v314 = vld [vmem:[%s307 + $0xc] sm:$0xf]
        %v315 = vld [vmem:[#allocation2] sm:$0xf]
        %v316 = vld [vmem:[#allocation2 + $0x4] sm:$0xf]
        %v317 = vld [vmem:[#allocation2 + $0x8] sm:$0xf]
        %v318 = vld [vmem:[#allocation2 + $0xc] sm:$0xf]
        %v319 = vld [vmem:[%s2] sm:$0x1]
        %v321 = vlaneseq
        %v322 = vshrl.u32 %v321, 7
        %v323 = vsub.s32 0, %v322
        %v324 = vrot.slane %v319, %v323
        %v330 = vunpack.c.l.b16 %v311
        %v331 = vunpack.c.l.b16 %v312
        %v332 = vunpack.c.l.b16 %v313
        %v333 = vunpack.c.l.b16 %v314
        %v334 = vpack.c.b16 %v331, %v330
        %v335 = vpack.c.b16 %v333, %v332
        %v340 = vunpack.c.l.b16 %v315
        %v341 = vunpack.c.l.b16 %v316
        %v342 = vunpack.c.l.b16 %v317
        %v343 = vunpack.c.l.b16 %v318
        %v344 = vpack.c.b16 %v341, %v340
        %v345 = vpack.c.b16 %v343, %v342
        %vm348 = vcmask 261120
        %v350 = vsel %vm348, %v334, 0
        %v353 = vsel %vm348, %v335, 0
        %355 = vmatprep.subr.bf16.mxu0 0
        %356 = vmatpush1.bf16.msra.mxu0 %v344
        %357 = vmatprep.subr.bf16.mxu0 0
        %358 = vmatpush1.bf16.msra.mxu0 %v345
        %359 = vmatprep.subr.bf16.mxu0 0
        %360 = vmatpush1.bf16.msra.mxu0 0
        %361 = vmatprep.subr.bf16.mxu0 0
        %362 = vmatpush1.bf16.msra.mxu0 0
        %363 = vmatprep.subr.bf16.mxu0 0
        %364 = vmatpush1.bf16.msra.mxu0 0
        %365 = vmatprep.subr.bf16.mxu0 0
        %366 = vmatpush1.bf16.msra.mxu0 0
        %367 = vmatprep.subr.bf16.mxu0 0
        %368 = vmatpush1.bf16.msra.mxu0 0
        %369 = vmatprep.subr.bf16.mxu0 0
        %370 = vmatpush1.bf16.msra.mxu0 0
        %371 = vmatprep.subr.bf16.mxu0 0
        %372 = vmatpush1.bf16.msra.mxu0 0
        %373 = vmatprep.subr.bf16.mxu0 0
        %374 = vmatpush1.bf16.msra.mxu0 0
        %375 = vmatprep.subr.bf16.mxu0 0
        %376 = vmatpush1.bf16.msra.mxu0 0
        %377 = vmatprep.subr.bf16.mxu0 0
        %378 = vmatpush1.bf16.msra.mxu0 0
        %379 = vmatprep.subr.bf16.mxu0 0
        %380 = vmatpush1.bf16.msra.mxu0 0
        %381 = vmatprep.subr.bf16.mxu0 0
        %382 = vmatpush1.bf16.msra.mxu0 0
        %383 = vmatprep.subr.bf16.mxu0 0
        %384 = vmatpush1.bf16.msra.mxu0 0
        %385 = vmatprep.subr.bf16.mxu0 0
        %386 = vmatpush1.bf16.msra.mxu0 0
        %387 = vmatprep.mubr.bf16.mxu0 0
        %388 = vmatmul.mubr.bf16.gmra.mrb[0].mxu0 %v350
        %v389 = vpop.f32.mrb[0].mxu0
        %v390 = vadd.f32 %v324, %v389
        %v391 = vpop.f32.mrb[0].mxu0
        %v392 = vpop.f32.mrb[0].mxu0
        %v393 = vadd.f32 %v324, %v392
        %v394 = vpop.f32.mrb[0].mxu0
        %395 = vmatprep.mubr.bf16.mxu0 0
        %396 = vmatmul.mubr.bf16.gmra.mrb[0].mxu0 %v353
        %v397 = vpop.f32.mrb[0].mxu0
        %v398 = vadd.f32 %v324, %v397
        %v399 = vpop.f32.mrb[0].mxu0
        %v400 = vpop.f32.mrb[0].mxu0
        %v401 = vadd.f32 %v324, %v400
        %v402 = vpop.f32.mrb[0].mxu0
        %403 = vdwg.mxu0
        %v404 = vmax.f32 %v390, 0.0
        %v405 = vmax.f32 %v393, 0.0
        %v406 = vmax.f32 %v398, 0.0
        %v407 = vmax.f32 %v401, 0.0
        %v408 = vpack.c.bf16 %v405, %v404
        %v409 = vpack.c.bf16 %v407, %v406
        %v410 = vld [vmem:[#allocation5] sm:$0xf]
        %v411 = vld [vmem:[#allocation5 + $0x4] sm:$0xf]
        %v412 = vld [vmem:[#allocation5 + $0x8] sm:$0xf]
        %v413 = vld [vmem:[#allocation5 + $0xc] sm:$0xf]
        %v414 = vld [vmem:[#allocation5 + $0x10] sm:$0xf]
        %v415 = vld [vmem:[#allocation5 + $0x14] sm:$0xf]
        %v416 = vld [vmem:[#allocation5 + $0x18] sm:$0xf]
        %v417 = vld [vmem:[#allocation5 + $0x1c] sm:$0xf]
        %v418 = vld [vmem:[#allocation5 + $0x20] sm:$0xf]
        %v419 = vld [vmem:[#allocation5 + $0x24] sm:$0xf]
        %v420 = vld [vmem:[#allocation5 + $0x28] sm:$0xf]
        %v421 = vld [vmem:[#allocation5 + $0x2c] sm:$0xf]
        %v422 = vld [vmem:[#allocation5 + $0x30] sm:$0xf]
        %v423 = vld [vmem:[#allocation5 + $0x34] sm:$0xf]
        %v424 = vld [vmem:[#allocation5 + $0x38] sm:$0xf]
        %v425 = vld [vmem:[#allocation5 + $0x3c] sm:$0xf]
        %v426 = vld [vmem:[%s4] sm:$0x1]
        %v428 = vlaneseq
        %v429 = vshrl.u32 %v428, 7
        %v430 = vsub.s32 0, %v429
        %v431 = vrot.slane %v426, %v430
        %v449 = vunpack.c.l.b16 %v410
        %v450 = vunpack.c.l.b16 %v411
        %v451 = vunpack.c.l.b16 %v412
        %v452 = vunpack.c.l.b16 %v413
        %v453 = vunpack.c.l.b16 %v414
        %v454 = vunpack.c.l.b16 %v415
        %v455 = vunpack.c.l.b16 %v416
        %v456 = vunpack.c.l.b16 %v417
        %v457 = vunpack.c.l.b16 %v418
        %v458 = vunpack.c.l.b16 %v419
        %v459 = vunpack.c.l.b16 %v420
        %v460 = vunpack.c.l.b16 %v421
        %v461 = vunpack.c.l.b16 %v422
        %v462 = vunpack.c.l.b16 %v423
        %v463 = vunpack.c.l.b16 %v424
        %v464 = vunpack.c.l.b16 %v425
        %v465 = vpack.c.b16 %v450, %v449
        %v466 = vpack.c.b16 %v452, %v451
        %v467 = vpack.c.b16 %v454, %v453
        %v468 = vpack.c.b16 %v456, %v455
        %v469 = vpack.c.b16 %v458, %v457
        %v470 = vpack.c.b16 %v460, %v459
        %v471 = vpack.c.b16 %v462, %v461
        %v472 = vpack.c.b16 %v464, %v463
        %481 = vmatprep.subr.bf16.mxu0 0
        %482 = vmatpush1.bf16.msra.mxu0 %v465
        %483 = vmatprep.subr.bf16.mxu0 0
        %484 = vmatpush1.bf16.msra.mxu0 %v466
        %485 = vmatprep.subr.bf16.mxu0 0
        %486 = vmatpush1.bf16.msra.mxu0 %v467
        %487 = vmatprep.subr.bf16.mxu0 0
        %488 = vmatpush1.bf16.msra.mxu0 %v468
        %489 = vmatprep.subr.bf16.mxu0 0
        %490 = vmatpush1.bf16.msra.mxu0 %v469
        %491 = vmatprep.subr.bf16.mxu0 0
        %492 = vmatpush1.bf16.msra.mxu0 %v470
        %493 = vmatprep.subr.bf16.mxu0 0
        %494 = vmatpush1.bf16.msra.mxu0 %v471
        %495 = vmatprep.subr.bf16.mxu0 0
        %496 = vmatpush1.bf16.msra.mxu0 %v472
        %497 = vmatprep.subr.bf16.mxu0 0
        %498 = vmatpush1.bf16.msra.mxu0 0
        %499 = vmatprep.subr.bf16.mxu0 0
        %500 = vmatpush1.bf16.msra.mxu0 0
        %501 = vmatprep.subr.bf16.mxu0 0
        %502 = vmatpush1.bf16.msra.mxu0 0
        %503 = vmatprep.subr.bf16.mxu0 0
        %504 = vmatpush1.bf16.msra.mxu0 0
        %505 = vmatprep.subr.bf16.mxu0 0
        %506 = vmatpush1.bf16.msra.mxu0 0
        %507 = vmatprep.subr.bf16.mxu0 0
        %508 = vmatpush1.bf16.msra.mxu0 0
        %509 = vmatprep.subr.bf16.mxu0 0
        %510 = vmatpush1.bf16.msra.mxu0 0
        %511 = vmatprep.subr.bf16.mxu0 0
        %512 = vmatpush1.bf16.msra.mxu0 0
        %513 = vmatprep.mubr.bf16.mxu0 0
        %514 = vmatmul.mubr.bf16.gmra.mrb[0].mxu0 %v408
        %v515 = vpop.f32.mrb[0].mxu0
        %v516 = vadd.f32 %v431, %v515
        %v517 = vpop.f32.mrb[0].mxu0
        %v518 = vpop.f32.mrb[0].mxu0
        %v519 = vadd.f32 %v431, %v518
        %v520 = vpop.f32.mrb[0].mxu0
        %521 = vmatprep.mubr.bf16.mxu0 0
        %522 = vmatmul.mubr.bf16.gmra.mrb[0].mxu0 %v409
        %v523 = vpop.f32.mrb[0].mxu0
        %v524 = vadd.f32 %v431, %v523
        %v525 = vpop.f32.mrb[0].mxu0
        %v526 = vpop.f32.mrb[0].mxu0
        %v527 = vadd.f32 %v431, %v526
        %v528 = vpop.f32.mrb[0].mxu0
        %529 = vdwg.mxu0
        %v530 = vmax.f32 %v516, 0.0
        %v531 = vmax.f32 %v519, 0.0
        %v532 = vmax.f32 %v524, 0.0
        %v533 = vmax.f32 %v527, 0.0
        %v534 = vpack.c.bf16 %v531, %v530
        %v535 = vpack.c.bf16 %v533, %v532
        %v536 = vld [vmem:[%s5] sm:$0xf]
        %v537 = vld [vmem:[%s5 + $0x4] sm:$0xf]
        %v538 = vld [vmem:[%s5 + $0x8] sm:$0xf]
        %v539 = vld [vmem:[%s5 + $0xc] sm:$0xf]
        %v540 = vld [vmem:[%s5 + $0x10] sm:$0xf]
        %v541 = vld [vmem:[%s5 + $0x14] sm:$0xf]
        %v542 = vld [vmem:[%s5 + $0x18] sm:$0xf]
        %v543 = vld [vmem:[%s5 + $0x1c] sm:$0xf]
        %v544 = vld [vmem:[%s5 + $0x20] sm:$0xf]
        %v545 = vld [vmem:[%s5 + $0x24] sm:$0xf]
        %v546 = vld [vmem:[%s5 + $0x28] sm:$0xf]
        %v547 = vld [vmem:[%s5 + $0x2c] sm:$0xf]
        %v548 = vld [vmem:[%s5 + $0x30] sm:$0xf]
        %v549 = vld [vmem:[%s5 + $0x34] sm:$0xf]
        %v550 = vld [vmem:[%s5 + $0x38] sm:$0xf]
        %v551 = vld [vmem:[%s5 + $0x3c] sm:$0xf]
        %v552 = vld [vmem:[%s6] sm:$0x1]
        %v554 = vlaneseq
        %v555 = vshrl.u32 %v554, 7
        %v556 = vsub.s32 0, %v555
        %v557 = vrot.slane %v552, %v556
        %v575 = vunpack.c.l.b16 %v536
        %v576 = vunpack.c.l.b16 %v537
        %v577 = vunpack.c.l.b16 %v538
        %v578 = vunpack.c.l.b16 %v539
        %v579 = vunpack.c.l.b16 %v540
        %v580 = vunpack.c.l.b16 %v541
        %v581 = vunpack.c.l.b16 %v542
        %v582 = vunpack.c.l.b16 %v543
        %v583 = vunpack.c.l.b16 %v544
        %v584 = vunpack.c.l.b16 %v545
        %v585 = vunpack.c.l.b16 %v546
        %v586 = vunpack.c.l.b16 %v547
        %v587 = vunpack.c.l.b16 %v548
        %v588 = vunpack.c.l.b16 %v549
        %v589 = vunpack.c.l.b16 %v550
        %v590 = vunpack.c.l.b16 %v551
        %v591 = vpack.c.b16 %v576, %v575
        %v592 = vpack.c.b16 %v578, %v577
        %v593 = vpack.c.b16 %v580, %v579
        %v594 = vpack.c.b16 %v582, %v581
        %v595 = vpack.c.b16 %v584, %v583
        %v596 = vpack.c.b16 %v586, %v585
        %v597 = vpack.c.b16 %v588, %v587
        %v598 = vpack.c.b16 %v590, %v589
        %607 = vmatprep.subr.bf16.mxu0 0
        %608 = vmatpush1.bf16.msra.mxu0 %v591
        %609 = vmatprep.subr.bf16.mxu0 0
        %610 = vmatpush1.bf16.msra.mxu0 %v592
        %611 = vmatprep.subr.bf16.mxu0 0
        %612 = vmatpush1.bf16.msra.mxu0 %v593
        %613 = vmatprep.subr.bf16.mxu0 0
        %614 = vmatpush1.bf16.msra.mxu0 %v594
        %615 = vmatprep.subr.bf16.mxu0 0
        %616 = vmatpush1.bf16.msra.mxu0 %v595
        %617 = vmatprep.subr.bf16.mxu0 0
        %618 = vmatpush1.bf16.msra.mxu0 %v596
        %619 = vmatprep.subr.bf16.mxu0 0
        %620 = vmatpush1.bf16.msra.mxu0 %v597
        %621 = vmatprep.subr.bf16.mxu0 0
        %622 = vmatpush1.bf16.msra.mxu0 %v598
        %623 = vmatprep.subr.bf16.mxu0 0
        %624 = vmatpush1.bf16.msra.mxu0 0
        %625 = vmatprep.subr.bf16.mxu0 0
        %626 = vmatpush1.bf16.msra.mxu0 0
        %627 = vmatprep.subr.bf16.mxu0 0
        %628 = vmatpush1.bf16.msra.mxu0 0
        %629 = vmatprep.subr.bf16.mxu0 0
        %630 = vmatpush1.bf16.msra.mxu0 0
        %631 = vmatprep.subr.bf16.mxu0 0
        %632 = vmatpush1.bf16.msra.mxu0 0
        %633 = vmatprep.subr.bf16.mxu0 0
        %634 = vmatpush1.bf16.msra.mxu0 0
        %635 = vmatprep.subr.bf16.mxu0 0
        %636 = vmatpush1.bf16.msra.mxu0 0
        %637 = vmatprep.subr.bf16.mxu0 0
        %638 = vmatpush1.bf16.msra.mxu0 0
        %639 = vmatprep.mubr.bf16.mxu0 0
        %640 = vmatmul.mubr.bf16.gmra.mrb[0].mxu0 %v534
        %v641 = vpop.f32.mrb[0].mxu0
        %v642 = vadd.f32 %v557, %v641
        %v643 = vpop.f32.mrb[0].mxu0
        %v644 = vpop.f32.mrb[0].mxu0
        %v645 = vadd.f32 %v557, %v644
        %v646 = vpop.f32.mrb[0].mxu0
        %647 = vmatprep.mubr.bf16.mxu0 0
        %648 = vmatmul.mubr.bf16.gmra.mrb[0].mxu0 %v535
        %v649 = vpop.f32.mrb[0].mxu0
        %v650 = vadd.f32 %v557, %v649
        %v651 = vpop.f32.mrb[0].mxu0
        %v652 = vpop.f32.mrb[0].mxu0
        %v653 = vadd.f32 %v557, %v652
        %v654 = vpop.f32.mrb[0].mxu0
        %655 = vdwg.mxu0
        %656 = vmax.xlane.f32.xlu0 %v642
        %v657 = vpop.xlane.xlu0 %656
        %658 = vmax.xlane.f32.xlu0 %v645
        %v659 = vpop.xlane.xlu0 %658
        %660 = vmax.xlane.f32.xlu0 %v650
        %v661 = vpop.xlane.xlu0 %660
        %662 = vmax.xlane.f32.xlu0 %v653
        %v663 = vpop.xlane.xlu0 %662
        %v664 = vsub.f32 %v642, %v657
        %v665 = vsub.f32 %v645, %v659
        %v666 = vsub.f32 %v650, %v661
        %v667 = vsub.f32 %v653, %v663
        %v668 = vmul.f32 %v664, 1.442695
        %v669 = vpow.pop %v668
        %v670 = vmul.f32 %v665, 1.442695
        %v671 = vpow.pop %v670
        %v672 = vmul.f32 %v666, 1.442695
        %v673 = vpow.pop %v672
        %v674 = vmul.f32 %v667, 1.442695
        %v675 = vpow.pop %v674
        %676 = vadd.xlane.f32.xlu0 %v669
        %v677 = vpop.xlane.xlu0 %676
        %678 = vadd.xlane.f32.xlu0 %v671
        %v679 = vpop.xlane.xlu0 %678
        %680 = vadd.xlane.f32.xlu0 %v673
        %v681 = vpop.xlane.xlu0 %680
        %682 = vadd.xlane.f32.xlu0 %v675
        %v683 = vpop.xlane.xlu0 %682
        %v684 = vlog2.pop %v677
        %v685 = vmul.f32 %v684, 0.6931472
        %v686 = vlog2.pop %v679
        %v687 = vmul.f32 %v686, 0.6931472
        %v688 = vlog2.pop %v681
        %v689 = vmul.f32 %v688, 0.6931472
        %v690 = vlog2.pop %v683
        %v691 = vmul.f32 %v690, 0.6931472
        %v692 = vsub.f32 %v664, %v685
        %v693 = vsub.f32 %v665, %v687
        %v694 = vsub.f32 %v666, %v689
        %v695 = vsub.f32 %v667, %v691
        %696 = vst [vmem:[%s302] sm:$0xff] %v692
        %697 = vst [vmem:[%s302 + $0x8] sm:$0xff] %v693
        %698 = vst [vmem:[%s302 + $0x10] sm:$0xff] %v694
        %699 = vst [vmem:[%s302 + $0x18] sm:$0xff] %v695
        %s700 = sand.u32 %s183, 1
        %s701 = scalar_lea.sflag [#allocation4], %s700
        %s702 = sand.u32 %s183, 1
        %s703 = smul.addr %s702, 32
        %s704 = scalar_lea.vmem [#allocation7], %s703
        // Predicated region
        $region57: #{tpu_custom_call.1} parent=47 // pred_check
          %p705 = pneg %p193
        $region58: #{tpu_custom_call.1} parent=47 // pred_check_branch
          %707 = sbr.rel (%p705) target = $region60
        $region59: #{tpu_custom_call.1} parent=47 // pred_region
          %s708 = smul.u32 4, %s23
          %s710 = ssub.s32 512, 512
          %711 = vsyncadd %s701, %s710
          %s712 = smul.addr %s708, 128
          %s713 = scalar_lea.hbm %s7, %s712
          %s714 = sshll.u32 %s704, 4
          %s715 = int_to_ptr.vmem [resolvable:$true] %s714
          %720 = dma.vmem_to_hbm [thread:$0]  %s715, 512, %s713, %s701, 128, 128, 8
        $region60: #{tpu_custom_call.1} parent=47 // pred_fallthru
          _
      $region48: #{tpu_custom_call.1} parent=5 // pred_fallthru
        _
      %p721 = scmp.le.s32.totalorder 2, %s18
      // Predicated region
      $region61: #{tpu_custom_call.1} parent=5 // pred_check
        %p722 = pneg %p721
      $region62: #{tpu_custom_call.1} parent=5 // pred_check_branch
        %724 = sbr.rel (%p722) target = $region64
      $region63: #{tpu_custom_call.1} parent=5 // pred_region
        %s725 = ssub.s32 %s18, 2
        // Predicated region
        $region65: #{tpu_custom_call.1} parent=63 // pred_check
          %p726 = pneg %p199
        $region66: #{tpu_custom_call.1} parent=63 // pred_check_branch
          %728 = sbr.rel (%p726) target = $region68
        $region67: #{tpu_custom_call.1} parent=63 // pred_region
          %s729 = sand.u32 %s184, 1
          %s730 = scalar_lea.sflag [#allocation4], %s729
          %s731 = sand.u32 %s184, 1
          %s732 = smul.addr %s731, 32
          %s733 = scalar_lea.vmem [#allocation7], %s732
          %734 = dma.done %s730, 512
        $region68: #{tpu_custom_call.1} parent=63 // pred_fallthru
          _
      $region64: #{tpu_custom_call.1} parent=5 // pred_fallthru
        _
    $region6: #{tpu_custom_call.1} parent=1 // loop_footer
      %s22 = sadd.s32 1, %s18
    $region7: #{tpu_custom_call.1} parent=1 // loop_footer_branch
      %17 = sbr.rel target = $region3
    $region8: #{tpu_custom_call.1} parent=1 // loop_exit
      _
    %735 = vsyncpa [#allocation3], 1
    %s736 = scalar_lea.sflag [#allocation3], 1
    %737 = vsyncpa %s736, 1
    %738 = vsyncpa [#allocation6], 1
    %739 = vsyncpa [#allocation4], 1
    %s740 = scalar_lea.sflag [#allocation4], 1
    %741 = vsyncpa %s740, 1

</llo_original>
